<compile_context>
chip_gen: v7x
topology: tpu7x:2x2x1
jax: 0.10.0
libtpu: 0.0.40
codegen_flags: <defaults>
</compile_context>

<pallas_src>
import functools

import jax
import jax.numpy as jnp
from jax.experimental import pallas as pl
from jax.experimental.pallas import tpu as pltpu

_NEG_BIG = jnp.float32(-1e30)  # finite "minus infinity" for masked logits


def _ce_loss_kernel(logits_ref, targets_ref, loss_ref, valid_ref,
                    m_sc, l_sc, t_sc, *, n_rows, n_cls, tile_n, tile_c):
    i = pl.program_id(0)          # batch-tile index   ("parallel")
    j = pl.program_id(1)          # class-tile index   ("arbitrary", reduction)

    @pl.when(j == 0)
    def _init():
        m_sc[...] = jnp.full_like(m_sc, -jnp.inf)
        l_sc[...] = jnp.zeros_like(l_sc)
        t_sc[...] = jnp.zeros_like(t_sc)

    # Cast in-kernel: HBM traffic stays in the input dtype (bf16 for training).
    logits = logits_ref[...].astype(jnp.float32)          # (tile_n, tile_c)
    targets = targets_ref[...]                             # (tile_n, 1) int32

    # Global class ids for this tile (lanes are the class axis).
    class_ids = (jax.lax.broadcasted_iota(jnp.int32, (tile_n, tile_c), 1)
                 + j * tile_c)

    # Mask out-of-range class columns (only needed for a partial last tile).
    if n_cls % tile_c != 0:
        logits = jnp.where(class_ids < n_cls, logits, _NEG_BIG)

    # ---- Online logsumexp update (all intermediates kept 2-D, keepdims). ----
    tile_max = jnp.max(logits, axis=-1, keepdims=True)     # (tile_n, 1)
    m_new = jnp.maximum(m_sc[...], tile_max)
    l_sc[...] = (l_sc[...] * jnp.exp(m_sc[...] - m_new)
                 + jnp.sum(jnp.exp(logits - m_new), axis=-1, keepdims=True))
    m_sc[...] = m_new

    # Target logit lives in exactly one class tile; accumulate via a select.
    t_sc[...] += jnp.sum(jnp.where(class_ids == targets, logits, 0.0),
                         axis=-1, keepdims=True)

    # ---- Finalize at the last class tile: per-row loss + valid flag. ----
    @pl.when(j == pl.num_programs(1) - 1)
    def _finalize():
        row_ids = (i * tile_n
                   + jax.lax.broadcasted_iota(jnp.int32, (tile_n, 1), 0))
        valid = (row_ids < n_rows) & (targets >= 0) & (targets < n_cls)
        loss = m_sc[...] + jnp.log(l_sc[...]) - t_sc[...]
        loss_ref[...] = jnp.where(valid, loss, 0.0)
        valid_ref[...] = valid.astype(jnp.float32)


def ce_loss(logits, targets, *, tile_n=None, tile_c=None):
    """Cross-entropy loss, mean reduction over valid (non-ignored) targets.

    logits: (N, C) float array (any float dtype; cast to f32 in-kernel).
    targets: (N,) integer class indices; out-of-range (e.g. -100) rows ignored.
    Returns a scalar float32.
    """
    n, c = logits.shape
    if tile_n is None:
        tile_n = n if n <= 256 else 256          # multiple of 8 (or == N)
    if tile_c is None:
        tile_c = c if c <= 2048 else 2048        # lane-dense (or == C)

    grid = (pl.cdiv(n, tile_n), pl.cdiv(c, tile_c))
    padded_n = grid[0] * tile_n

    targets_2d = targets.astype(jnp.int32).reshape(n, 1)

    kernel = functools.partial(_ce_loss_kernel, n_rows=n, n_cls=c,
                               tile_n=tile_n, tile_c=tile_c)

    loss_rows, valid_rows = pl.pallas_call(
        kernel,
        out_shape=(jax.ShapeDtypeStruct((padded_n, 1), jnp.float32),
                   jax.ShapeDtypeStruct((padded_n, 1), jnp.float32)),
        grid_spec=pltpu.PrefetchScalarGridSpec(
            num_scalar_prefetch=0,
            grid=grid,
            in_specs=[
                pl.BlockSpec((tile_n, tile_c), lambda i, j: (i, j)),
                pl.BlockSpec((tile_n, 1), lambda i, j: (i, 0)),
            ],
            out_specs=[
                pl.BlockSpec((tile_n, 1), lambda i, j: (i, 0)),
                pl.BlockSpec((tile_n, 1), lambda i, j: (i, 0)),
            ],
            scratch_shapes=[
                pltpu.VMEM((tile_n, 1), jnp.float32),   # running max m
                pltpu.VMEM((tile_n, 1), jnp.float32),   # running sum l
                pltpu.VMEM((tile_n, 1), jnp.float32),   # target-logit acc
            ],
        ),
        compiler_params=pltpu.CompilerParams(
            dimension_semantics=("parallel", "arbitrary"),
            vmem_limit_bytes=48 * 1024 * 1024,
        ),
        cost_estimate=pl.CostEstimate(
            flops=5 * n * c,
            transcendentals=n * c,
            bytes_accessed=n * c * logits.dtype.itemsize + n * 4
                           + 2 * padded_n * 4,
        ),
    )(logits, targets_2d)

    # Tiny final reduction in plain JAX (keeps the grid core-parallel).
    return jnp.sum(loss_rows) / jnp.sum(valid_rows)


def _reference_ce_loss(logits, targets):
    logits = logits.astype(jnp.float32)
    logp = jax.nn.log_softmax(logits, axis=-1)
    valid = (targets >= 0) & (targets < logits.shape[1])
    safe_t = jnp.where(valid, targets, 0).astype(jnp.int32)
    nll = -jnp.take_along_axis(logp, safe_t[:, None], axis=-1)[:, 0]
    nll = jnp.where(valid, nll, 0.0)
    return jnp.sum(nll) / jnp.sum(valid.astype(jnp.float32))


if __name__ == "__main__":
    key = jax.random.PRNGKey(0)

    # Test 1: small, single tile, f32.
    k1, k2, key = jax.random.split(key, 3)
    N, C = 8, 32
    logits = jax.random.normal(k1, (N, C), dtype=jnp.float32)
    targets = jax.random.randint(k2, (N,), 0, C, dtype=jnp.int32)
    loss = jax.block_until_ready(ce_loss(logits, targets))
    ref = jax.block_until_ready(_reference_ce_loss(logits, targets))
    assert jnp.allclose(loss, ref, atol=1e-5, rtol=1e-5), (loss, ref)

    # Test 2: multi-tile grid (2 batch tiles x 2 class tiles), online LSE,
    # with one ignored target (PyTorch default ignore_index=-100).
    k1, k2, key = jax.random.split(key, 3)
    N2, C2 = 16, 256
    logits2 = jax.random.normal(k1, (N2, C2), dtype=jnp.float32) * 3.0
    targets2 = jax.random.randint(k2, (N2,), 0, C2, dtype=jnp.int32)
    targets2 = targets2.at[3].set(-100)
    loss2 = jax.block_until_ready(ce_loss(logits2, targets2,
                                          tile_n=8, tile_c=128))
    ref2 = jax.block_until_ready(_reference_ce_loss(logits2, targets2))
    assert jnp.allclose(loss2, ref2, atol=1e-5, rtol=1e-5), (loss2, ref2)

    # Test 3: bf16 logits stay bf16 in HBM; cast happens in-kernel.
    logits_bf16 = logits.astype(jnp.bfloat16)
    loss3 = jax.block_until_ready(ce_loss(logits_bf16, targets))
    ref3 = jax.block_until_ready(_reference_ce_loss(logits_bf16, targets))
    assert jnp.allclose(loss3, ref3, atol=1e-4, rtol=1e-4), (loss3, ref3)

    print("KERNEL_OK")
</pallas_src>

<mosaic_0001>
module attributes {stable_mosaic.version = 11 : i64} {
  func.func @_ce_loss_kernel(%arg0: i32, %arg1: i32, %arg2: memref<8x32xf32, #tpu.memory_space<vmem>>, %arg3: memref<8x1xi32, #tpu.memory_space<vmem>>, %arg4: memref<8x1xf32, #tpu.memory_space<vmem>>, %arg5: memref<8x1xf32, #tpu.memory_space<vmem>>, %arg6: memref<8x1xf32, #tpu.memory_space<vmem>>, %arg7: memref<8x1xf32, #tpu.memory_space<vmem>>, %arg8: memref<8x1xf32, #tpu.memory_space<vmem>>) attributes {dimension_semantics = [#tpu.dimension_semantics<parallel>, #tpu.dimension_semantics<arbitrary>], iteration_bounds = array<i64: 1, 1>, scalar_prefetch = 0 : i64, scratch_operands = 3 : i64, tpu.core_type = #tpu.core_type<tc>, window_params = [{transform_indices = @transform_0, window_bounds = array<i64: 8, 32>}, {transform_indices = @transform_1, window_bounds = array<i64: 8, 1>}, {transform_indices = @transform_2, window_bounds = array<i64: 8, 1>}, {transform_indices = @transform_3, window_bounds = array<i64: 8, 1>}]} {
    %c0_i32 = arith.constant 0 : i32
    %0 = arith.cmpi eq, %arg1, %c0_i32 : i32
    %1 = arith.extui %0 : i1 to i32
    %c0_i32_0 = arith.constant 0 : i32
    %2 = arith.cmpi ne, %1, %c0_i32_0 : i32
    scf.if %2 {
      %cst_23 = arith.constant 0xFF800000 : f32
      %38 = vector.broadcast %cst_23 : f32 to vector<8x1xf32>
      %c0_24 = arith.constant 0 : index
      %c0_25 = arith.constant 0 : index
      %39 = vector.load %arg6[%c0_24, %c0_25] : memref<8x1xf32, #tpu.memory_space<vmem>>, vector<8x1xf32>
      tpu.vector_store %arg6[%c0_24, %c0_25], %38 {strides = array<i32>} : memref<8x1xf32, #tpu.memory_space<vmem>>, vector<8x1xf32>,
      %cst_26 = arith.constant 0.000000e+00 : f32
      %40 = vector.broadcast %cst_26 : f32 to vector<8x1xf32>
      %c0_27 = arith.constant 0 : index
      %c0_28 = arith.constant 0 : index
      %41 = vector.load %arg7[%c0_27, %c0_28] : memref<8x1xf32, #tpu.memory_space<vmem>>, vector<8x1xf32>
      tpu.vector_store %arg7[%c0_27, %c0_28], %40 {strides = array<i32>} : memref<8x1xf32, #tpu.memory_space<vmem>>, vector<8x1xf32>,
      %cst_29 = arith.constant 0.000000e+00 : f32
      %42 = vector.broadcast %cst_29 : f32 to vector<8x1xf32>
      %c0_30 = arith.constant 0 : index
      %c0_31 = arith.constant 0 : index
      %43 = vector.load %arg8[%c0_30, %c0_31] : memref<8x1xf32, #tpu.memory_space<vmem>>, vector<8x1xf32>
      tpu.vector_store %arg8[%c0_30, %c0_31], %42 {strides = array<i32>} : memref<8x1xf32, #tpu.memory_space<vmem>>, vector<8x1xf32>,
    } else {
    }
    %c0 = arith.constant 0 : index
    %c0_1 = arith.constant 0 : index
    %3 = vector.load %arg2[%c0, %c0_1] : memref<8x32xf32, #tpu.memory_space<vmem>>, vector<8x32xf32>
    %c0_2 = arith.constant 0 : index
    %c0_3 = arith.constant 0 : index
    %4 = vector.load %arg3[%c0_2, %c0_3] : memref<8x1xi32, #tpu.memory_space<vmem>>, vector<8x1xi32>
    %5 = tpu.iota {dimensions = array<i32: 1>} : vector<8x32xi32>
    %c32_i32 = arith.constant 32 : i32
    %6 = arith.muli %arg1, %c32_i32 : i32
    %7 = vector.broadcast %6 : i32 to vector<8x32xi32>
    %8 = arith.addi %5, %7 : vector<8x32xi32>
    %cst = arith.constant dense<0xFF800000> : vector<8xf32>
    %9 = vector.multi_reduction <maximumf>, %3, %cst [1] : vector<8x32xf32> to vector<8xf32>
    %10 = vector.shape_cast %9 : vector<8xf32> to vector<8x1xf32>
    %c0_4 = arith.constant 0 : index
    %c0_5 = arith.constant 0 : index
    %11 = vector.load %arg6[%c0_4, %c0_5] : memref<8x1xf32, #tpu.memory_space<vmem>>, vector<8x1xf32>
    %12 = arith.maximumf %11, %10 : vector<8x1xf32>
    %c0_6 = arith.constant 0 : index
    %c0_7 = arith.constant 0 : index
    %13 = vector.load %arg7[%c0_6, %c0_7] : memref<8x1xf32, #tpu.memory_space<vmem>>, vector<8x1xf32>
    %c0_8 = arith.constant 0 : index
    %c0_9 = arith.constant 0 : index
    %14 = vector.load %arg6[%c0_8, %c0_9] : memref<8x1xf32, #tpu.memory_space<vmem>>, vector<8x1xf32>
    %15 = arith.subf %14, %12 : vector<8x1xf32>
    %16 = math.exp %15 : vector<8x1xf32>
    %17 = arith.mulf %13, %16 : vector<8x1xf32>
    %18 = vector.broadcast %12 : vector<8x1xf32> to vector<8x32xf32>
    %19 = arith.subf %3, %18 : vector<8x32xf32>
    %20 = math.exp %19 : vector<8x32xf32>
    %cst_10 = arith.constant dense<0.000000e+00> : vector<8xf32>
    %21 = vector.multi_reduction <add>, %20, %cst_10 [1] : vector<8x32xf32> to vector<8xf32>
    %22 = vector.shape_cast %21 : vector<8xf32> to vector<8x1xf32>
    %23 = arith.addf %17, %22 : vector<8x1xf32>
    %c0_11 = arith.constant 0 : index
    %c0_12 = arith.constant 0 : index
    %24 = vector.load %arg7[%c0_11, %c0_12] : memref<8x1xf32, #tpu.memory_space<vmem>>, vector<8x1xf32>
    tpu.vector_store %arg7[%c0_11, %c0_12], %23 {strides = array<i32>} : memref<8x1xf32, #tpu.memory_space<vmem>>, vector<8x1xf32>,
    %c0_13 = arith.constant 0 : index
    %c0_14 = arith.constant 0 : index
    %25 = vector.load %arg6[%c0_13, %c0_14] : memref<8x1xf32, #tpu.memory_space<vmem>>, vector<8x1xf32>
    tpu.vector_store %arg6[%c0_13, %c0_14], %12 {strides = array<i32>} : memref<8x1xf32, #tpu.memory_space<vmem>>, vector<8x1xf32>,
    %c0_15 = arith.constant 0 : index
    %c0_16 = arith.constant 0 : index
    %26 = vector.load %arg8[%c0_15, %c0_16] : memref<8x1xf32, #tpu.memory_space<vmem>>, vector<8x1xf32>
    %27 = vector.broadcast %4 : vector<8x1xi32> to vector<8x32xi32>
    %28 = arith.cmpi eq, %8, %27 : vector<8x32xi32>
    %cst_17 = arith.constant 0.000000e+00 : f32
    %29 = vector.broadcast %cst_17 : f32 to vector<8x32xf32>
    %30 = arith.select %28, %3, %29 : vector<8x32xi1>, vector<8x32xf32>
    %cst_18 = arith.constant dense<0.000000e+00> : vector<8xf32>
    %31 = vector.multi_reduction <add>, %30, %cst_18 [1] : vector<8x32xf32> to vector<8xf32>
    %32 = vector.shape_cast %31 : vector<8xf32> to vector<8x1xf32>
    %33 = arith.addf %26, %32 : vector<8x1xf32>
    %c0_19 = arith.constant 0 : index
    %c0_20 = arith.constant 0 : index
    %34 = vector.load %arg8[%c0_19, %c0_20] : memref<8x1xf32, #tpu.memory_space<vmem>>, vector<8x1xf32>
    tpu.vector_store %arg8[%c0_19, %c0_20], %33 {strides = array<i32>} : memref<8x1xf32, #tpu.memory_space<vmem>>, vector<8x1xf32>,
    %c0_i32_21 = arith.constant 0 : i32
    %35 = arith.cmpi eq, %arg1, %c0_i32_21 : i32
    %36 = arith.extui %35 : i1 to i32
    %c0_i32_22 = arith.constant 0 : i32
    %37 = arith.cmpi ne, %36, %c0_i32_22 : i32
    scf.if %37 {
      %c8_i32 = arith.constant 8 : i32
      %38 = arith.muli %arg0, %c8_i32 : i32
      %39 = tpu.iota {dimensions = array<i32: 0>} : vector<8x1xi32>
      %40 = vector.broadcast %38 : i32 to vector<8x1xi32>
      %41 = arith.addi %40, %39 : vector<8x1xi32>
      %c8_i32_23 = arith.constant 8 : i32
      %42 = vector.broadcast %c8_i32_23 : i32 to vector<8x1xi32>
      %43 = arith.cmpi slt, %41, %42 : vector<8x1xi32>
      %c0_i32_24 = arith.constant 0 : i32
      %44 = vector.broadcast %c0_i32_24 : i32 to vector<8x1xi32>
      %45 = arith.cmpi sge, %4, %44 : vector<8x1xi32>
      %46 = arith.andi %43, %45 : vector<8x1xi1>
      %c32_i32_25 = arith.constant 32 : i32
      %47 = vector.broadcast %c32_i32_25 : i32 to vector<8x1xi32>
      %48 = arith.cmpi slt, %4, %47 : vector<8x1xi32>
      %49 = arith.andi %46, %48 : vector<8x1xi1>
      %c0_26 = arith.constant 0 : index
      %c0_27 = arith.constant 0 : index
      %50 = vector.load %arg6[%c0_26, %c0_27] : memref<8x1xf32, #tpu.memory_space<vmem>>, vector<8x1xf32>
      %c0_28 = arith.constant 0 : index
      %c0_29 = arith.constant 0 : index
      %51 = vector.load %arg7[%c0_28, %c0_29] : memref<8x1xf32, #tpu.memory_space<vmem>>, vector<8x1xf32>
      %52 = math.log %51 : vector<8x1xf32>
      %53 = arith.addf %50, %52 : vector<8x1xf32>
      %c0_30 = arith.constant 0 : index
      %c0_31 = arith.constant 0 : index
      %54 = vector.load %arg8[%c0_30, %c0_31] : memref<8x1xf32, #tpu.memory_space<vmem>>, vector<8x1xf32>
      %55 = arith.subf %53, %54 : vector<8x1xf32>
      %cst_32 = arith.constant 0.000000e+00 : f32
      %56 = vector.broadcast %cst_32 : f32 to vector<8x1xf32>
      %57 = arith.select %49, %55, %56 : vector<8x1xi1>, vector<8x1xf32>
      %c0_33 = arith.constant 0 : index
      %c0_34 = arith.constant 0 : index
      %58 = vector.load %arg4[%c0_33, %c0_34] : memref<8x1xf32, #tpu.memory_space<vmem>>, vector<8x1xf32>
      tpu.vector_store %arg4[%c0_33, %c0_34], %57 {strides = array<i32>} : memref<8x1xf32, #tpu.memory_space<vmem>>, vector<8x1xf32>,
      %59 = arith.extui %49 : vector<8x1xi1> to vector<8x1xi32>
      %60 = arith.sitofp %59 : vector<8x1xi32> to vector<8x1xf32>
      %c0_35 = arith.constant 0 : index
      %c0_36 = arith.constant 0 : index
      %61 = vector.load %arg5[%c0_35, %c0_36] : memref<8x1xf32, #tpu.memory_space<vmem>>, vector<8x1xf32>
      tpu.vector_store %arg5[%c0_35, %c0_36], %60 {strides = array<i32>} : memref<8x1xf32, #tpu.memory_space<vmem>>, vector<8x1xf32>,
    } else {
    }
    return
  }
  func.func @transform_0(%arg0: i32, %arg1: i32) -> (i32, i32) {
    %c0_i32 = arith.constant 0 : i32
    return %arg0, %arg1 : i32, i32
  }
  func.func @transform_1(%arg0: i32, %arg1: i32) -> (i32, i32) {
    %c0_i32 = arith.constant 0 : i32
    %c0_i32_0 = arith.constant 0 : i32
    return %arg0, %c0_i32 : i32, i32
  }
  func.func @transform_2(%arg0: i32, %arg1: i32) -> (i32, i32) {
    %c0_i32 = arith.constant 0 : i32
    %c0_i32_0 = arith.constant 0 : i32
    return %arg0, %c0_i32 : i32, i32
  }
  func.func @transform_3(%arg0: i32, %arg1: i32) -> (i32, i32) {
    %c0_i32 = arith.constant 0 : i32
    %c0_i32_0 = arith.constant 0 : i32
    return %arg0, %c0_i32 : i32, i32
  }
}

</mosaic_0001>

<llo_original>
// kernel: tpu_custom_call.1
$region0: #{tpu_custom_call.1}
  #allocation0 [shape = 'u32[]', space=smem, size = 0x4, offset = 0x4, fixed_abs, tag = 'smem constant byte address 0x4 - core index']
  #allocation1 [shape = 'u32[144,128]{1,0:T(1,128)}', space=vmem, size = 0x12000, scoped, tag = 'internal scratch']
  #allocation2 [shape = 'f32[8,1]{1,0:T(8,128)}', space=vmem, size = 0x1000, scoped, tag = 'scratch operand']
  #allocation3 [shape = 'f32[8,1]{1,0:T(8,128)}', space=vmem, size = 0x1000, scoped, tag = 'scratch operand']
  #allocation4 [shape = 'f32[8,1]{1,0:T(8,128)}', space=vmem, size = 0x1000, scoped, tag = 'scratch operand']
  %s0 = inlined_call_operand.vmem [shape: f32[8,32], index: 0, kind: input, shape index: {}]
  %s1 = inlined_call_operand.vmem [shape: s32[8,1], index: 1, kind: input, shape index: {}]
  %s2 = inlined_call_operand.vmem [shape: f32[8,1], index: 2, kind: output, shape index: {0}]
  %s3 = inlined_call_operand.vmem [shape: f32[8,1], index: 3, kind: output, shape index: {1}]
  %4 = xla_tuple %s2, %s3
  %s5 = sld [smem:[#allocation0]]
  $region34: #{tpu_custom_call.1} parent=0
    _
  %s7 = ssub.s32 1, %s5
  %s8 = scalar_select 0, %s7, %s5
  // Predicated region
  $region2: #{tpu_custom_call.1} parent=0 // pred_check
    _
  $region3: #{tpu_custom_call.1} parent=0 // pred_check_branch
    %10 = sbr.rel (0) target = $region5
  $region4: #{tpu_custom_call.1} parent=0 // pred_region
    _
  $region5: #{tpu_custom_call.1} parent=0 // pred_fallthru
    _
  // Predicated region
  $region6: #{tpu_custom_call.1} parent=0 // pred_check
    _
  $region7: #{tpu_custom_call.1} parent=0 // pred_check_branch
    %12 = sbr.rel (0) target = $region9
  $region8: #{tpu_custom_call.1} parent=0 // pred_region
    _
  $region9: #{tpu_custom_call.1} parent=0 // pred_fallthru
    _
  %p13 = scmp.eq.s32.totalorder 0, 0
  // Predicated region
  $region10: #{tpu_custom_call.1} parent=0 // pred_check
    %p14 = pneg %p13
  $region11: #{tpu_custom_call.1} parent=0 // pred_check_branch
    %16 = sbr.rel (%p14) target = $region13
  $region12: #{tpu_custom_call.1} parent=0 // pred_region
    %vm17 = vcmask 7168
    %18 = vst.msk [vmem:[#allocation2] sm:$0xff] %vm17, -inf
    %19 = vst.msk [vmem:[#allocation3] sm:$0xff] %vm17, 0.0
    %20 = vst.msk [vmem:[#allocation4] sm:$0xff] %vm17, 0.0
  $region13: #{tpu_custom_call.1} parent=0 // pred_fallthru
    _
  %v21 = vld [vmem:[%s0] sm:$0xff]
  %v22 = vld [vmem:[%s1] sm:$0xff]
  %v23 = vlaneseq
  %v24 = vand.u32 %v23, 127
  %s25 = smul.u32 0, 32
  %v26 = vstv %s25
  %v27 = vadd.s32 %v24, %v26
  %vm28 = vcmask 261120
  %v29 = vsel %vm28, %v21, -inf
  %30 = vmax.xlane.f32.xlu0 %v29
  %v31 = vpop.xlane.xlu0 %30
  %v32 = vld [vmem:[#allocation2] sm:$0xff]
  %v33 = vmax.f32 %v32, %v31
  %v34 = vld [vmem:[#allocation3] sm:$0xff]
  %v35 = vsub.f32 %v32, %v33
  %v36 = vmul.f32 %v35, 1.442695
  %v37 = vpow.pop %v36
  %v38 = vmul.f32 %v34, %v37
  %40 = vset.pattern.permute.xlu0 0
  %41 = vperm.xlu0 %40, %v33
  %v42 = vpop.permute.xlu0 %41
  %v44 = vsub.f32 %v21, %v42
  %v45 = vmul.f32 %v44, 1.442695
  %v46 = vpow.pop %v45
  %v47 = vsel %vm28, %v46, 0.0
  %48 = vadd.xlane.f32.xlu0 %v47
  %v49 = vpop.xlane.xlu0 %48
  %v50 = vadd.f32 %v38, %v49
  %vm51 = vcmask 7168
  %52 = vst.msk [vmem:[#allocation3] sm:$0xff] %vm51, %v50
  %53 = vst.msk [vmem:[#allocation2] sm:$0xff] %vm51, %v33
  %v54 = vld [vmem:[#allocation4] sm:$0xff]
  %55 = vset.pattern.permute.xlu0 0
  %56 = vperm.xlu0 %55, %v22
  %v57 = vpop.permute.xlu0 %56
  %vm58 = vcmp.eq.s32.totalorder %v27, %v57
  %v59 = vsel %vm58, %v21, 0.0
  %v60 = vsel %vm28, %v59, 0.0
  %61 = vadd.xlane.f32.xlu0 %v60
  %v62 = vpop.xlane.xlu0 %61
  %v63 = vadd.f32 %v54, %v62
  %64 = vst.msk [vmem:[#allocation4] sm:$0xff] %vm51, %v63
  // Predicated region
  $region14: #{tpu_custom_call.1} parent=0 // pred_check
    %p65 = pneg %p13
  $region15: #{tpu_custom_call.1} parent=0 // pred_check_branch
    %67 = sbr.rel (%p65) target = $region17
  $region16: #{tpu_custom_call.1} parent=0 // pred_region
    %s68 = smul.u32 0, 8
    %v69 = vlaneseq
    %v70 = vshrl.u32 %v69, 7
    %v71 = vstv %s68
    %v72 = vadd.s32 %v71, %v70
    %vm73 = vcmp.lt.s32.totalorder %v72, 8
    %vm74 = vcmp.ge.s32.totalorder %v22, 0
    %vm75 = vmand %vm73, %vm74
    %vm76 = vcmp.lt.s32.totalorder %v22, 32
    %vm77 = vmand %vm75, %vm76
    %v78 = vld [vmem:[#allocation2] sm:$0xff]
    %v79 = vld [vmem:[#allocation3] sm:$0xff]
    %v80 = vlog2.pop %v79
    %v81 = vmul.f32 %v80, 0.6931472
    %v82 = vadd.f32 %v78, %v81
    %v83 = vld [vmem:[#allocation4] sm:$0xff]
    %v84 = vsub.f32 %v82, %v83
    %v85 = vsel %vm77, %v84, 0.0
    %86 = vst.msk [vmem:[%s2] sm:$0xff] %vm51, %v85
    %v87 = vsel %vm77, 1, 0
    %v88 = vcvt.s32.f32 %v87
    %89 = vst.msk [vmem:[%s3] sm:$0xff] %vm51, %v88
  $region17: #{tpu_custom_call.1} parent=0 // pred_fallthru
    _
  // Predicated region
  $region18: #{tpu_custom_call.1} parent=0 // pred_check
    _
  $region19: #{tpu_custom_call.1} parent=0 // pred_check_branch
    %91 = sbr.rel (0) target = $region21
  $region20: #{tpu_custom_call.1} parent=0 // pred_region
    _
  $region21: #{tpu_custom_call.1} parent=0 // pred_fallthru
    _
  // Predicated region
  $region22: #{tpu_custom_call.1} parent=0 // pred_check
    _
  $region23: #{tpu_custom_call.1} parent=0 // pred_check_branch
    %93 = sbr.rel (0) target = $region25
  $region24: #{tpu_custom_call.1} parent=0 // pred_region
    _
  $region25: #{tpu_custom_call.1} parent=0 // pred_fallthru
    _
  // Predicated region
  $region26: #{tpu_custom_call.1} parent=0 // pred_check
    _
  $region27: #{tpu_custom_call.1} parent=0 // pred_check_branch
    %95 = sbr.rel (0) target = $region29
  $region28: #{tpu_custom_call.1} parent=0 // pred_region
    _
  $region29: #{tpu_custom_call.1} parent=0 // pred_fallthru
    _
  // Predicated region
  $region30: #{tpu_custom_call.1} parent=0 // pred_check
    _
  $region31: #{tpu_custom_call.1} parent=0 // pred_check_branch
    %97 = sbr.rel (0) target = $region33
  $region32: #{tpu_custom_call.1} parent=0 // pred_region
    _
  $region33: #{tpu_custom_call.1} parent=0 // pred_fallthru
    _

</llo_original>
